<compile_context>
chip_gen: v6e
topology: v6e:2x2x1
jax: 0.10.0
libtpu: 0.0.40
codegen_flags: <defaults>
</compile_context>

<pallas_src>
import functools

import jax
import jax.numpy as jnp
from jax.experimental import pallas as pl
from jax.experimental.pallas import tpu as pltpu


def convblock_kernel(x_ref, w_ref, b_ref, o_ref, *, H, W):
    # x_ref: (1, C, H*W)   one batch element, spatial flattened on lanes
    # w_ref: (O, 9*C)      weights; column index = (ky*3 + kx)*C + c
    # b_ref: (O, 1)        bias
    # o_ref: (1, O, H*W)   lane-dense output
    C = x_ref.shape[1]
    HW = H * W

    x2 = x_ref[0]                                        # (C, HW), native dtype

    # In-kernel zero padding: extend the flattened spatial axis by W+1 zero
    # lanes on each side.  Tap (ky, kx) is then the static lane slice starting
    # at ky*W + kx (reads that fall outside the image land in the zero border).
    zpad = jnp.zeros((C, W + 1), dtype=x2.dtype)
    xext = jnp.concatenate([zpad, x2, zpad], axis=1)     # (C, HW + 2W + 2)

    # Lane masks for the dx = -1 / +1 taps (their slices cross image rows at
    # w == 0 / w == W-1; the dy boundaries are handled by the zero border).
    w_idx = jax.lax.broadcasted_iota(jnp.int32, (1, HW), 1) % W
    left_ok = w_idx > 0              # valid when the tap reads column w-1
    right_ok = w_idx < (W - 1)       # valid when the tap reads column w+1

    slabs = []
    for ky in range(3):
        for kx in range(3):
            start = ky * W + kx
            sl = xext[:, start:start + HW]               # (C, HW)
            if kx == 0:
                sl = jnp.where(left_ok, sl, jnp.zeros_like(sl))
            elif kx == 2:
                sl = jnp.where(right_ok, sl, jnp.zeros_like(sl))
            slabs.append(sl)
    stacked = jnp.concatenate(slabs, axis=0)             # (9*C, HW)

    # Single fat-K MXU matmul: (O, 9C) x (9C, HW) -> (O, HW), f32 accumulation.
    acc = jnp.dot(w_ref[...], stacked, preferred_element_type=jnp.float32)
    acc = acc + b_ref[...].astype(jnp.float32)           # (O, 1) lane broadcast
    out = jnp.where(acc >= 0, acc, 0.2 * acc)            # LeakyReLU(0.2)
    o_ref[0] = out.astype(o_ref.dtype)


def conv_block(x_nchw, weight_ochw, bias, *, stride=1):
    """ConvBlock forward. x: (N, C, H, W); weight: (O, C, 3, 3); bias: (O,).
    Returns (N, O, H, W) to match the PyTorch module output layout."""
    # TODO(synk): general stride support (the module default stride=1 is implemented).
    assert stride == 1, "this kernel implements the default stride=1 case"
    N, C, H, W = x_nchw.shape
    O = weight_ochw.shape[0]
    HW = H * W

    # Only cheap reshapes here -- no jnp.pad / transpose of the activations.
    x_flat = x_nchw.reshape(N, C, HW)
    # (O, C, 3, 3) -> (O, ky, kx, C) -> (O, 9C); column = (ky*3 + kx)*C + c.
    w_flat = jnp.transpose(weight_ochw, (0, 2, 3, 1)).reshape(O, 9 * C)
    b2 = bias.reshape(O, 1)

    kernel = functools.partial(convblock_kernel, H=H, W=W)

    out_flat = pl.pallas_call(
        kernel,
        out_shape=jax.ShapeDtypeStruct((N, O, HW), x_nchw.dtype),
        grid_spec=pltpu.PrefetchScalarGridSpec(
            num_scalar_prefetch=0,
            grid=(N,),
            in_specs=[
                pl.BlockSpec((1, C, HW), lambda n: (n, 0, 0)),
                pl.BlockSpec((O, 9 * C), lambda n: (0, 0)),   # weights stay resident
                pl.BlockSpec((O, 1), lambda n: (0, 0)),       # bias stays resident
            ],
            out_specs=pl.BlockSpec((1, O, HW), lambda n: (n, 0, 0)),
        ),
        compiler_params=pltpu.CompilerParams(
            dimension_semantics=("parallel",),
            vmem_limit_bytes=32 * 1024 * 1024,
        ),
    )(x_flat, w_flat, b2)

    # TODO(synk): for large images add an H-tiled grid axis with a 2-row halo
    # (per-generation tile budget, esp. v7x's 64 MiB VMEM) instead of one whole
    # image per grid step.
    return out_flat.reshape(N, O, H, W)


def _reference(x_nchw, weight_ochw, bias):
    """Pure-JAX reference: NCHW conv (stride 1, pad 1) + LeakyReLU(0.2)."""
    out = jax.lax.conv_general_dilated(
        x_nchw, weight_ochw,
        window_strides=(1, 1), padding=((1, 1), (1, 1)),
        dimension_numbers=("NCHW", "OIHW", "NCHW"))
    out = out + bias.reshape(1, -1, 1, 1)
    return jnp.where(out >= 0, out, 0.2 * out)


if __name__ == "__main__":
    key = jax.random.PRNGKey(0)
    k_x, k_w, k_b = jax.random.split(key, 3)

    N, C, H, W = 2, 4, 16, 16
    O = 8  # out_channels

    x = jax.random.normal(k_x, (N, C, H, W), dtype=jnp.float32)
    # Deterministic init mimicking PyTorch Conv2d default (uniform in +/- 1/sqrt(fan_in)).
    fan_in = C * 3 * 3
    bound = 1.0 / (fan_in ** 0.5)
    weight = jax.random.uniform(k_w, (O, C, 3, 3), jnp.float32, -bound, bound)
    bias = jax.random.uniform(k_b, (O,), jnp.float32, -bound, bound)

    out = conv_block(x, weight, bias)
    out = jax.block_until_ready(out)

    ref = _reference(x, weight, bias)
    assert out.shape == (N, O, H, W)
    assert jnp.allclose(out, ref, atol=1e-4, rtol=1e-4)

    print("KERNEL_OK")
</pallas_src>

<mosaic_0001>
module attributes {stable_mosaic.version = 11 : i64} {
  func.func @convblock_kernel(%arg0: i32, %arg1: memref<1x4x256xf32, #tpu.memory_space<vmem>>, %arg2: memref<8x36xf32, #tpu.memory_space<vmem>>, %arg3: memref<8x1xf32, #tpu.memory_space<vmem>>, %arg4: memref<1x8x256xf32, #tpu.memory_space<vmem>>) attributes {dimension_semantics = [#tpu.dimension_semantics<parallel>], iteration_bounds = array<i64: 2>, scalar_prefetch = 0 : i64, scratch_operands = 0 : i64, tpu.core_type = #tpu.core_type<tc>, window_params = [{transform_indices = @transform_0, window_bounds = array<i64: 1, 4, 256>}, {pipeline_mode = #tpu.pipeline_mode<synchronous>, transform_indices = @transform_1, window_bounds = array<i64: 8, 36>}, {pipeline_mode = #tpu.pipeline_mode<synchronous>, transform_indices = @transform_2, window_bounds = array<i64: 8, 1>}, {transform_indices = @transform_3, window_bounds = array<i64: 1, 8, 256>}]} {
    %c0 = arith.constant 0 : index
    %c0_0 = arith.constant 0 : index
    %c0_1 = arith.constant 0 : index
    %0 = vector.load %arg1[%c0, %c0_0, %c0_1] : memref<1x4x256xf32, #tpu.memory_space<vmem>>, vector<1x4x256xf32>
    %1 = vector.shape_cast %0 : vector<1x4x256xf32> to vector<4x256xf32>
    %cst = arith.constant 0.000000e+00 : f32
    %2 = vector.broadcast %cst : f32 to vector<4x17xf32>
    %3 = tpu.concatenate %2, %1, %2 in 1 : vector<4x17xf32>, vector<4x256xf32>, vector<4x17xf32> -> vector<4x290xf32>
    %4 = tpu.iota {dimensions = array<i32: 1>} : vector<1x256xi32>
    %c16_i32 = arith.constant 16 : i32
    %c0_i32 = arith.constant 0 : i32
    %5 = arith.cmpi eq, %c16_i32, %c0_i32 : i32
    %c1_i32 = arith.constant 1 : i32
    %6 = arith.select %5, %c1_i32, %c16_i32 : i32
    %7 = vector.broadcast %6 : i32 to vector<1x256xi32>
    %8 = arith.remsi %4, %7 : vector<1x256xi32>
    %c0_i32_2 = arith.constant 0 : i32
    %9 = vector.broadcast %c0_i32_2 : i32 to vector<1x256xi32>
    %10 = arith.cmpi ne, %8, %9 : vector<1x256xi32>
    %c0_i32_3 = arith.constant 0 : i32
    %11 = vector.broadcast %c0_i32_3 : i32 to vector<1x256xi32>
    %12 = arith.cmpi slt, %8, %11 : vector<1x256xi32>
    %c0_i32_4 = arith.constant 0 : i32
    %13 = arith.cmpi slt, %6, %c0_i32_4 : i32
    %14 = vector.broadcast %13 : i1 to vector<1x256xi1>
    %15 = vector.broadcast %14 : vector<1x256xi1> to vector<1x256xi1>
    %16 = arith.xori %12, %15 : vector<1x256xi1>
    %17 = arith.andi %16, %10 : vector<1x256xi1>
    %18 = vector.broadcast %6 : i32 to vector<1x256xi32>
    %19 = arith.addi %8, %18 : vector<1x256xi32>
    %20 = arith.select %17, %19, %8 : vector<1x256xi1>, vector<1x256xi32>
    %c0_i32_5 = arith.constant 0 : i32
    %21 = vector.broadcast %c0_i32_5 : i32 to vector<1x256xi32>
    %22 = arith.cmpi sgt, %20, %21 : vector<1x256xi32>
    %c15_i32 = arith.constant 15 : i32
    %23 = vector.broadcast %c15_i32 : i32 to vector<1x256xi32>
    %24 = arith.cmpi slt, %20, %23 : vector<1x256xi32>
    %25 = vector.extract_strided_slice %3 {offsets = [0, 0], sizes = [4, 256], strides = [1, 1]} : vector<4x290xf32> to vector<4x256xf32>
    %cst_6 = arith.constant 0.000000e+00 : f32
    %26 = vector.broadcast %cst_6 : f32 to vector<4x256xf32>
    %27 = vector.shape_cast %22 : vector<1x256xi1> to vector<1x256xi1>
    %28 = vector.broadcast %27 : vector<1x256xi1> to vector<4x256xi1>
    %29 = arith.select %28, %25, %26 : vector<4x256xi1>, vector<4x256xf32>
    %30 = vector.extract_strided_slice %3 {offsets = [0, 1], sizes = [4, 256], strides = [1, 1]} : vector<4x290xf32> to vector<4x256xf32>
    %31 = vector.extract_strided_slice %3 {offsets = [0, 2], sizes = [4, 256], strides = [1, 1]} : vector<4x290xf32> to vector<4x256xf32>
    %cst_7 = arith.constant 0.000000e+00 : f32
    %32 = vector.broadcast %cst_7 : f32 to vector<4x256xf32>
    %33 = vector.shape_cast %24 : vector<1x256xi1> to vector<1x256xi1>
    %34 = vector.broadcast %33 : vector<1x256xi1> to vector<4x256xi1>
    %35 = arith.select %34, %31, %32 : vector<4x256xi1>, vector<4x256xf32>
    %36 = vector.extract_strided_slice %3 {offsets = [0, 16], sizes = [4, 256], strides = [1, 1]} : vector<4x290xf32> to vector<4x256xf32>
    %cst_8 = arith.constant 0.000000e+00 : f32
    %37 = vector.broadcast %cst_8 : f32 to vector<4x256xf32>
    %38 = vector.shape_cast %22 : vector<1x256xi1> to vector<1x256xi1>
    %39 = vector.broadcast %38 : vector<1x256xi1> to vector<4x256xi1>
    %40 = arith.select %39, %36, %37 : vector<4x256xi1>, vector<4x256xf32>
    %41 = vector.extract_strided_slice %3 {offsets = [0, 17], sizes = [4, 256], strides = [1, 1]} : vector<4x290xf32> to vector<4x256xf32>
    %42 = vector.extract_strided_slice %3 {offsets = [0, 18], sizes = [4, 256], strides = [1, 1]} : vector<4x290xf32> to vector<4x256xf32>
    %cst_9 = arith.constant 0.000000e+00 : f32
    %43 = vector.broadcast %cst_9 : f32 to vector<4x256xf32>
    %44 = vector.shape_cast %24 : vector<1x256xi1> to vector<1x256xi1>
    %45 = vector.broadcast %44 : vector<1x256xi1> to vector<4x256xi1>
    %46 = arith.select %45, %42, %43 : vector<4x256xi1>, vector<4x256xf32>
    %47 = vector.extract_strided_slice %3 {offsets = [0, 32], sizes = [4, 256], strides = [1, 1]} : vector<4x290xf32> to vector<4x256xf32>
    %cst_10 = arith.constant 0.000000e+00 : f32
    %48 = vector.broadcast %cst_10 : f32 to vector<4x256xf32>
    %49 = vector.shape_cast %22 : vector<1x256xi1> to vector<1x256xi1>
    %50 = vector.broadcast %49 : vector<1x256xi1> to vector<4x256xi1>
    %51 = arith.select %50, %47, %48 : vector<4x256xi1>, vector<4x256xf32>
    %52 = vector.extract_strided_slice %3 {offsets = [0, 33], sizes = [4, 256], strides = [1, 1]} : vector<4x290xf32> to vector<4x256xf32>
    %53 = vector.extract_strided_slice %3 {offsets = [0, 34], sizes = [4, 256], strides = [1, 1]} : vector<4x290xf32> to vector<4x256xf32>
    %cst_11 = arith.constant 0.000000e+00 : f32
    %54 = vector.broadcast %cst_11 : f32 to vector<4x256xf32>
    %55 = vector.shape_cast %24 : vector<1x256xi1> to vector<1x256xi1>
    %56 = vector.broadcast %55 : vector<1x256xi1> to vector<4x256xi1>
    %57 = arith.select %56, %53, %54 : vector<4x256xi1>, vector<4x256xf32>
    %58 = tpu.concatenate %29, %30, %35, %40, %41, %46, %51, %52, %57 in 0 : vector<4x256xf32>, vector<4x256xf32>, vector<4x256xf32>, vector<4x256xf32>, vector<4x256xf32>, vector<4x256xf32>, vector<4x256xf32>, vector<4x256xf32>, vector<4x256xf32> -> vector<36x256xf32>
    %c0_12 = arith.constant 0 : index
    %c0_13 = arith.constant 0 : index
    %59 = vector.load %arg2[%c0_12, %c0_13] : memref<8x36xf32, #tpu.memory_space<vmem>>, vector<8x36xf32>
    %cst_14 = arith.constant dense<0.000000e+00> : vector<8x256xf32>
    %60 = tpu.matmul %59, %58, %cst_14 {dimension_numbers = #tpu.dot_dimension_numbers<[1], [0], [0], [1], [0, 0, 1, 1], [], []>} : vector<8x36xf32>, vector<36x256xf32>, vector<8x256xf32> -> vector<8x256xf32>
    %c0_15 = arith.constant 0 : index
    %c0_16 = arith.constant 0 : index
    %61 = vector.load %arg3[%c0_15, %c0_16] : memref<8x1xf32, #tpu.memory_space<vmem>>, vector<8x1xf32>
    %62 = vector.broadcast %61 : vector<8x1xf32> to vector<8x256xf32>
    %63 = arith.addf %60, %62 : vector<8x256xf32>
    %cst_17 = arith.constant 0.000000e+00 : f32
    %64 = vector.broadcast %cst_17 : f32 to vector<8x256xf32>
    %65 = arith.cmpf oge, %63, %64 : vector<8x256xf32>
    %cst_18 = arith.constant 2.000000e-01 : f32
    %66 = vector.broadcast %cst_18 : f32 to vector<8x256xf32>
    %67 = arith.mulf %66, %63 : vector<8x256xf32>
    %68 = arith.select %65, %63, %67 : vector<8x256xi1>, vector<8x256xf32>
    %c0_19 = arith.constant 0 : index
    %c0_20 = arith.constant 0 : index
    %c0_21 = arith.constant 0 : index
    %69 = vector.load %arg4[%c0_19, %c0_20, %c0_21] : memref<1x8x256xf32, #tpu.memory_space<vmem>>, vector<1x8x256xf32>
    %70 = vector.shape_cast %69 : vector<1x8x256xf32> to vector<8x256xf32>
    %71 = vector.shape_cast %68 : vector<8x256xf32> to vector<1x8x256xf32>
    tpu.vector_store %arg4[%c0_19, %c0_20, %c0_21], %71 {strides = array<i32>} : memref<1x8x256xf32, #tpu.memory_space<vmem>>, vector<1x8x256xf32>,
    return
  }
  func.func @transform_0(%arg0: i32) -> (i32, i32, i32) {
    %c0_i32 = arith.constant 0 : i32
    %c0_i32_0 = arith.constant 0 : i32
    %c0_i32_1 = arith.constant 0 : i32
    return %arg0, %c0_i32, %c0_i32_0 : i32, i32, i32
  }
  func.func @transform_1(%arg0: i32) -> (i32, i32) {
    %c0_i32 = arith.constant 0 : i32
    %c0_i32_0 = arith.constant 0 : i32
    %c0_i32_1 = arith.constant 0 : i32
    return %c0_i32, %c0_i32_0 : i32, i32
  }
  func.func @transform_2(%arg0: i32) -> (i32, i32) {
    %c0_i32 = arith.constant 0 : i32
    %c0_i32_0 = arith.constant 0 : i32
    %c0_i32_1 = arith.constant 0 : i32
    return %c0_i32, %c0_i32_0 : i32, i32
  }
  func.func @transform_3(%arg0: i32) -> (i32, i32, i32) {
    %c0_i32 = arith.constant 0 : i32
    %c0_i32_0 = arith.constant 0 : i32
    %c0_i32_1 = arith.constant 0 : i32
    return %arg0, %c0_i32, %c0_i32_0 : i32, i32, i32
  }
}

</mosaic_0001>

<llo_original>
// kernel: tpu_custom_call.1
$region0: #{tpu_custom_call.1}
  #allocation0 [shape = 'u32[]', space=smem, size = 0x4, offset = 0x4, fixed_abs, tag = 'smem constant byte address 0x4 - core index']
  #allocation1 [shape = 'u32[144,128]{1,0:T(1,128)}', space=vmem, size = 0x12000, scoped, tag = 'internal scratch']
  %s0 = inlined_call_operand.hbm [shape: f32[2,4,256], index: 0, kind: input, shape index: {}]
  %s1 = inlined_call_operand.vmem [shape: f32[8,36], index: 1, kind: input, shape index: {}]
  %s2 = inlined_call_operand.vmem [shape: f32[8,1], index: 2, kind: input, shape index: {}]
  %s3 = inlined_call_operand.hbm [shape: f32[2,8,256], index: 3, kind: output, shape index: {}]
  %s4 = sld [smem:[#allocation0]]
  $region49: #{tpu_custom_call.1} parent=0
    _
  %s6 = ssub.s32 1, %s4
  %s7 = scalar_select 0, %s6, %s4
  $region1: #{tpu_custom_call.1} parent=0
    #allocation2 [shape = 'u8[8192]{0}', space=vmem, size = 0x2000, scoped, tag = 'input window, operand 0']
    #allocation3 [shape = 's32[2]{0}', space=sflag, size = 0x8, scoped, tag = 'scoped memory for tpu_custom_call.1']
    #allocation4 [shape = 's32[2]{0}', space=sflag, size = 0x8, scoped, tag = 'scoped memory for tpu_custom_call.1']
    #allocation5 [shape = 'u8[16384]{0}', space=vmem, size = 0x4000, scoped, tag = 'output window, operand 0']
    %8 = vsyncpa [#allocation3], 0
    %s9 = scalar_lea.sflag [#allocation3], 1
    %10 = vsyncpa %s9, 0
    %11 = vsyncpa [#allocation4], 0
    %s12 = scalar_lea.sflag [#allocation4], 1
    %13 = vsyncpa %s12, 0
    loop: start=0, step=1, limit=4
    $region2: #{tpu_custom_call.1} parent=1 // loop_pre_header
      _
    $region3: #{tpu_custom_call.1} parent=1 // loop_header
      %s15 = sphi 0, %s19
      %p16 = scmp.ge.s32.totalorder %s15, 4
      %s25 = sphi 0, %s27
      %s28 = sphi 0, %s25
      %s29 = sphi 0, %s28
      %s45 = sphi 0, %s29
      %s49 = sphi 0, %s49
      %s51 = sphi 0, %s49
      %s52 = sphi 0, %s51
      %s66 = sphi 0, %s52
      %s70 = sphi 0, %s70
      %s72 = sphi 0, %s70
      %s73 = sphi 0, %s72
      %s87 = sphi 0, %s73
      %s93 = sphi 0, %s95
      %s96 = sphi 0, %s93
      %s97 = sphi 0, %s96
      %s113 = sphi 0, %s97
    $region4: #{tpu_custom_call.1} parent=1 // loop_header_branch
      %18 = sbr.rel (%p16) target = $region8
    $region5: #{tpu_custom_call.1} parent=1 // loop_body
      %s20 = ssub.s32 %s15, 1
      %s21 = ssub.s32 %s15, 2
      %s22 = sadd.s32 %s15, 1
      %s23 = ssub.s32 %s15, %s22
      %p24 = scmp.eq.s32.totalorder %s23, 0
      %s26 = sadd.s32 %s25, 1
      %s27 = scalar_select %p24, %s25, %s26
      %p30 = pneg %p24
      %p31 = scmp.eq.s32.totalorder %s15, 1
      %p32 = por %p30, %p31
      %p33 = scmp.ne.s32.totalorder %s25, %s28
      %p34 = scmp.eq.s32.totalorder %s15, 0
      %p35 = por %p33, %p34
      %p36 = scmp.ne.s32.totalorder %s25, %s28
      %p37 = scmp.eq.s32.totalorder %s20, 1
      %p38 = por %p36, %p37
      %p39 = scmp.ne.s32.totalorder %s28, %s29
      %p40 = scmp.eq.s32.totalorder %s20, 0
      %p41 = por %p39, %p40
      %p42 = scmp.ne.s32.totalorder %s28, %s29
      %p43 = scmp.eq.s32.totalorder %s21, 1
      %p44 = por %p42, %p43
      %p46 = scmp.ne.s32.totalorder %s29, %s45
      %p47 = scmp.eq.s32.totalorder %s21, 0
      %p48 = por %p46, %p47
      %s50 = sadd.s32 %s49, 1
      %p53 = scmp.eq.s32.totalorder %s15, 1
      %p54 = scmp.ne.s32.totalorder %s49, %s51
      %p55 = scmp.eq.s32.totalorder %s15, 0
      %p56 = por %p54, %p55
      %p57 = scmp.ne.s32.totalorder %s49, %s51
      %p58 = scmp.eq.s32.totalorder %s20, 1
      %p59 = por %p57, %p58
      %p60 = scmp.ne.s32.totalorder %s51, %s52
      %p61 = scmp.eq.s32.totalorder %s20, 0
      %p62 = por %p60, %p61
      %p63 = scmp.ne.s32.totalorder %s51, %s52
      %p64 = scmp.eq.s32.totalorder %s21, 1
      %p65 = por %p63, %p64
      %p67 = scmp.ne.s32.totalorder %s52, %s66
      %p68 = scmp.eq.s32.totalorder %s21, 0
      %p69 = por %p67, %p68
      %s71 = sadd.s32 %s70, 1
      %p74 = scmp.eq.s32.totalorder %s15, 1
      %p75 = scmp.ne.s32.totalorder %s70, %s72
      %p76 = scmp.eq.s32.totalorder %s15, 0
      %p77 = por %p75, %p76
      %p78 = scmp.ne.s32.totalorder %s70, %s72
      %p79 = scmp.eq.s32.totalorder %s20, 1
      %p80 = por %p78, %p79
      %p81 = scmp.ne.s32.totalorder %s72, %s73
      %p82 = scmp.eq.s32.totalorder %s20, 0
      %p83 = por %p81, %p82
      %p84 = scmp.ne.s32.totalorder %s72, %s73
      %p85 = scmp.eq.s32.totalorder %s21, 1
      %p86 = por %p84, %p85
      %p88 = scmp.ne.s32.totalorder %s73, %s87
      %p89 = scmp.eq.s32.totalorder %s21, 0
      %p90 = por %p88, %p89
      %s91 = ssub.s32 %s15, %s22
      %p92 = scmp.eq.s32.totalorder %s91, 0
      %s94 = sadd.s32 %s93, 1
      %s95 = scalar_select %p92, %s93, %s94
      %p98 = pneg %p92
      %p99 = scmp.eq.s32.totalorder %s15, 1
      %p100 = por %p98, %p99
      %p101 = scmp.ne.s32.totalorder %s93, %s96
      %p102 = scmp.eq.s32.totalorder %s15, 0
      %p103 = por %p101, %p102
      %p104 = scmp.ne.s32.totalorder %s93, %s96
      %p105 = scmp.eq.s32.totalorder %s20, 1
      %p106 = por %p104, %p105
      %p107 = scmp.ne.s32.totalorder %s96, %s97
      %p108 = scmp.eq.s32.totalorder %s20, 0
      %p109 = por %p107, %p108
      %p110 = scmp.ne.s32.totalorder %s96, %s97
      %p111 = scmp.eq.s32.totalorder %s21, 1
      %p112 = por %p110, %p111
      %p114 = scmp.ne.s32.totalorder %s97, %s113
      %p115 = scmp.eq.s32.totalorder %s21, 0
      %p116 = por %p114, %p115
      %p117 = scmp.le.s32.totalorder 1, %s15
      %p118 = scmp.lt.s32.totalorder %s15, 3
      %p119 = pnand %p117, %p118
      %p120 = pneg %p119
      // Predicated region
      $region9: #{tpu_custom_call.1} parent=5 // pred_check
        _
      $region10: #{tpu_custom_call.1} parent=5 // pred_check_branch
        %122 = sbr.rel (%p119) target = $region12
      $region11: #{tpu_custom_call.1} parent=5 // pred_region
        %s123 = ssub.s32 %s15, 1
        // Predicated region
        $region13: #{tpu_custom_call.1} parent=11 // pred_check
          %p124 = pneg %p62
        $region14: #{tpu_custom_call.1} parent=11 // pred_check_branch
          %126 = sbr.rel (%p124) target = $region16
        $region15: #{tpu_custom_call.1} parent=11 // pred_region
          _
        $region16: #{tpu_custom_call.1} parent=11 // pred_fallthru
          _
        // Predicated region
        $region17: #{tpu_custom_call.1} parent=11 // pred_check
          %p127 = pneg %p83
        $region18: #{tpu_custom_call.1} parent=11 // pred_check_branch
          %129 = sbr.rel (%p127) target = $region20
        $region19: #{tpu_custom_call.1} parent=11 // pred_region
          _
        $region20: #{tpu_custom_call.1} parent=11 // pred_fallthru
          _
      $region12: #{tpu_custom_call.1} parent=5 // pred_fallthru
        _
      %p130 = scmp.lt.s32.totalorder %s15, 2
      // Predicated region
      $region21: #{tpu_custom_call.1} parent=5 // pred_check
        %p131 = pneg %p130
      $region22: #{tpu_custom_call.1} parent=5 // pred_check_branch
        %133 = sbr.rel (%p131) target = $region24
      $region23: #{tpu_custom_call.1} parent=5 // pred_region
        // Predicated region
        $region25: #{tpu_custom_call.1} parent=23 // pred_check
          %p134 = pneg %p35
        $region26: #{tpu_custom_call.1} parent=23 // pred_check_branch
          %136 = sbr.rel (%p134) target = $region28
        $region27: #{tpu_custom_call.1} parent=23 // pred_region
          %s137 = sand.u32 %s25, 1
          %s138 = scalar_lea.sflag [#allocation3], %s137
          %s139 = sand.u32 %s25, 1
          %s140 = smul.addr %s139, 8
          %s141 = scalar_lea.vmem [#allocation2], %s140
          %s143 = ssub.s32 128, 128
          %144 = vsyncadd %s138, %s143
          %s145 = smul.addr %s15, 2
          %s146 = smul.addr %s145, 64
          %s147 = scalar_lea.hbm %s0, %s146
          %s149 = sshll.u32 %s141, 4
          %s150 = int_to_ptr.vmem [resolvable:$true] %s149
          %152 = dma.hbm_to_vmem [thread:$0]  %s147, 128, %s150, %s138
        $region28: #{tpu_custom_call.1} parent=23 // pred_fallthru
          _
      $region24: #{tpu_custom_call.1} parent=5 // pred_fallthru
        _
      %p153 = scmp.le.s32.totalorder 1, %s15
      %p154 = scmp.lt.s32.totalorder %s15, 3
      %p155 = pnand %p153, %p154
      %p156 = pneg %p155
      // Predicated region
      $region29: #{tpu_custom_call.1} parent=5 // pred_check
        _
      $region30: #{tpu_custom_call.1} parent=5 // pred_check_branch
        %158 = sbr.rel (%p155) target = $region32
      $region31: #{tpu_custom_call.1} parent=5 // pred_region
        %s159 = ssub.s32 %s15, 1
        %s160 = sand.u32 %s28, 1
        %s161 = scalar_lea.sflag [#allocation3], %s160
        %s162 = sand.u32 %s28, 1
        %s163 = smul.addr %s162, 8
        %s164 = scalar_lea.vmem [#allocation2], %s163
        // Predicated region
        $region33: #{tpu_custom_call.1} parent=31 // pred_check
          %p165 = pneg %p41
        $region34: #{tpu_custom_call.1} parent=31 // pred_check_branch
          %167 = sbr.rel (%p165) target = $region36
        $region35: #{tpu_custom_call.1} parent=31 // pred_region
          %168 = dma.done %s161, 128
        $region36: #{tpu_custom_call.1} parent=31 // pred_fallthru
          _
        %s169 = sand.u32 %s28, 1
        %s170 = scalar_lea.sflag [#allocation3], %s169
        %s171 = sand.u32 %s28, 1
        %s172 = smul.addr %s171, 8
        %s173 = scalar_lea.vmem [#allocation2], %s172
        %p174 = pneg %p41
        %p175 = pneg %p38
        %p176 = pneg %p62
        %p177 = pneg %p59
        %p178 = pneg %p83
        %p179 = pneg %p80
        %p180 = pneg %p109
        %p181 = pneg %p106
        %s182 = sand.u32 %s96, 1
        %s183 = scalar_lea.sflag [#allocation4], %s182
        %s184 = sand.u32 %s96, 1
        %s185 = smul.addr %s184, 16
        %s186 = scalar_lea.vmem [#allocation5], %s185
        %v187 = vld [vmem:[%s164] sm:$0xff]
        %v189 = vcombine.high %v187, %v187
        %190 = vrot.lane.b32.xlu0 %v187, 17
        %v191 = vpop.permute.xlu0 %190
        %192 = vrot.lane.b32.xlu0 %v189, 17
        %v193 = vpop.permute.xlu0 %192
        %vm194 = vcmask 138240
        %v195 = vsel %vm194, %v191, %v193
        %v199 = vsel %vm194, 0.0, %v191
        %v200 = vsel %vm194, %v193, 0.0
        %v201 = vlaneseq
        %v202 = vand.u32 %v201, 127
        %v203 = vadd.s32 %v202, 128
        %vm204 = vcmp.lt.s32.totalorder %v202, 0
        %v205 = vsub.s32 0, %v202
        %v206 = vsel %vm204, %v205, %v202
        %v207 = vshrl.u32 %v206, 4
        %v208 = vand.u32 %v206, 15
        %v209 = vsub.s32 0, %v208
        %v210 = vsel %vm204, %v209, %v208
        %vm211 = vcmp.lt.s32.totalorder %v203, 0
        %v212 = vsub.s32 0, %v203
        %v213 = vsel %vm211, %v212, %v203
        %v214 = vshrl.u32 %v213, 4
        %v215 = vand.u32 %v213, 15
        %v216 = vsub.s32 0, %v215
        %v217 = vsel %vm211, %v216, %v215
        %vm218 = vcmp.ne.s32.totalorder %v210, 0
        %vm219 = vcmp.ne.s32.totalorder %v217, 0
        %vm220 = vcmp.lt.s32.totalorder %v210, 0
        %vm221 = vcmp.lt.s32.totalorder %v217, 0
        %vm222 = vmand %vm220, %vm218
        %vm223 = vmand %vm221, %vm219
        %v224 = vadd.s32 %v210, 16
        %v225 = vadd.s32 %v217, 16
        %v226 = vsel %vm222, %v224, %v210
        %v227 = vsel %vm223, %v225, %v217
        %vm228 = vcmp.gt.s32.totalorder %v226, 0
        %vm229 = vcmp.gt.s32.totalorder %v227, 0
        %vm230 = vcmp.lt.s32.totalorder %v226, 15
        %vm231 = vcmp.lt.s32.totalorder %v227, 15
        %v232 = vsel %vm228, 1, 0
        %v233 = vsel %vm229, 1, 0
        %vm234 = vcmp.eq.s32.totalorder %v232, 1
        %vm235 = vcmp.eq.s32.totalorder %v233, 1
        %v236 = vsel %vm234, %v199, 0.0
        %v237 = vsel %vm235, %v195, 0.0
        %v238 = vsel %vm230, 1, 0
        %v239 = vsel %vm231, 1, 0
        %vm240 = vcmp.eq.s32.totalorder %v238, 1
        %vm241 = vcmp.eq.s32.totalorder %v239, 1
        %244 = vrot.lane.b32.xlu0 %v199, 126
        %v245 = vpop.permute.xlu0 %244
        %246 = vrot.lane.b32.xlu0 %v195, 126
        %v247 = vpop.permute.xlu0 %246
        %248 = vrot.lane.b32.xlu0 %v200, 126
        %v249 = vpop.permute.xlu0 %248
        %vm250 = vcmask 1031168
        %v251 = vsel %vm250, %v245, %v247
        %v252 = vsel %vm250, %v247, %v249
        %v255 = vsel %vm240, %v251, 0.0
        %v256 = vsel %vm241, %v252, 0.0
        %257 = vrot.lane.b32.xlu0 %v199, 112
        %v258 = vpop.permute.xlu0 %257
        %259 = vrot.lane.b32.xlu0 %v195, 112
        %v260 = vpop.permute.xlu0 %259
        %261 = vrot.lane.b32.xlu0 %v200, 112
        %v262 = vpop.permute.xlu0 %261
        %vm263 = vcmask 916480
        %v264 = vsel %vm263, %v258, %v260
        %v265 = vsel %vm263, %v260, %v262
        %v268 = vsel %vm234, %v264, 0.0
        %v269 = vsel %vm235, %v265, 0.0
        %270 = vrot.lane.b32.xlu0 %v199, 110
        %v271 = vpop.permute.xlu0 %270
        %272 = vrot.lane.b32.xlu0 %v195, 110
        %v273 = vpop.permute.xlu0 %272
        %274 = vrot.lane.b32.xlu0 %v200, 110
        %v275 = vpop.permute.xlu0 %274
        %vm276 = vcmask 900096
        %v277 = vsel %vm276, %v271, %v273
        %v278 = vsel %vm276, %v273, %v275
        %v281 = vsel %vm240, %v277, 0.0
        %v282 = vsel %vm241, %v278, 0.0
        %283 = vrot.lane.b32.xlu0 %v199, 96
        %v284 = vpop.permute.xlu0 %283
        %285 = vrot.lane.b32.xlu0 %v195, 96
        %v286 = vpop.permute.xlu0 %285
        %287 = vrot.lane.b32.xlu0 %v200, 96
        %v288 = vpop.permute.xlu0 %287
        %vm289 = vcmask 785408
        %v290 = vsel %vm289, %v284, %v286
        %v291 = vsel %vm289, %v286, %v288
        %v294 = vsel %vm234, %v290, 0.0
        %v295 = vsel %vm235, %v291, 0.0
        %296 = vrot.lane.b32.xlu0 %v199, 94
        %v297 = vpop.permute.xlu0 %296
        %298 = vrot.lane.b32.xlu0 %v195, 94
        %v299 = vpop.permute.xlu0 %298
        %300 = vrot.lane.b32.xlu0 %v200, 94
        %v301 = vpop.permute.xlu0 %300
        %vm302 = vcmask 769024
        %v303 = vsel %vm302, %v297, %v299
        %v304 = vsel %vm302, %v299, %v301
        %v307 = vsel %vm240, %v303, 0.0
        %v308 = vsel %vm241, %v304, 0.0
        %v309 = vrot.slane %v199, 4
        %v310 = vrot.slane %v195, 4
        %v311 = vrot.slane %v200, 4
        %312 = vrot.lane.b32.xlu0 %v309, 127
        %v313 = vpop.permute.xlu0 %312
        %314 = vrot.lane.b32.xlu0 %v310, 127
        %v315 = vpop.permute.xlu0 %314
        %316 = vrot.lane.b32.xlu0 %v311, 127
        %v317 = vpop.permute.xlu0 %316
        %vm318 = vcmask 1039360
        %v319 = vsel %vm318, %v313, %v315
        %v320 = vsel %vm318, %v315, %v317
        %v325 = vrot.slane %v268, 4
        %v326 = vrot.slane %v269, 4
        %329 = vrot.lane.b32.xlu0 %v199, 111
        %v330 = vpop.permute.xlu0 %329
        %331 = vrot.lane.b32.xlu0 %v195, 111
        %v332 = vpop.permute.xlu0 %331
        %333 = vrot.lane.b32.xlu0 %v200, 111
        %v334 = vpop.permute.xlu0 %333
        %vm335 = vcmask 908288
        %v336 = vsel %vm335, %v330, %v332
        %v337 = vsel %vm335, %v332, %v334
        %v342 = vrot.slane %v281, 4
        %v343 = vrot.slane %v282, 4
        %346 = vrot.lane.b32.xlu0 %v309, 95
        %v347 = vpop.permute.xlu0 %346
        %348 = vrot.lane.b32.xlu0 %v310, 95
        %v349 = vpop.permute.xlu0 %348
        %350 = vrot.lane.b32.xlu0 %v311, 95
        %v351 = vpop.permute.xlu0 %350
        %vm352 = vcmask 777216
        %v353 = vsel %vm352, %v347, %v349
        %v354 = vsel %vm352, %v349, %v351
        %vm357 = vcmask 1043456
        %v358 = vsel %vm357, %v236, %v319
        %v359 = vsel %vm357, %v237, %v320
        %v360 = vsel %vm357, %v255, %v325
        %v361 = vsel %vm357, %v256, %v326
        %v362 = vsel %vm357, %v336, %v342
        %v363 = vsel %vm357, %v337, %v343
        %v364 = vsel %vm357, %v294, %v353
        %v365 = vsel %vm357, %v295, %v354
        %v366 = vld [vmem:[%s1] sm:$0xff]
        %v367 = vld [vmem:[%s2] sm:$0xff]
        %369 = vset.pattern.permute.xlu0 0
        %370 = vperm.xlu0 %369, %v367
        %v371 = vpop.permute.xlu0 %370
        %vm373 = vcmask 293888
        %v375 = vsel %vm373, %v366, 0
        %v378 = vsel %vm357, %v307, 0
        %v381 = vsel %vm357, %v308, 0
        %383 = vmatprep.subr.mxu0 0.0
        %384 = vmatpush1.msra.mxu0 0.0
        %385 = vmatprep.subr.mxu0 0.0
        %386 = vmatpush1.msra.mxu0 0.0
        %387 = vmatprep.subr.mxu0 0.0
        %388 = vmatpush1.msra.mxu0 0.0
        %389 = vmatprep.subr.mxu0 0.0
        %390 = vmatpush1.msra.mxu0 0.0
        %391 = vmatprep.subr.mxu0 0.0
        %392 = vmatpush1.msra.mxu0 0.0
        %393 = vmatprep.subr.mxu0 0.0
        %394 = vmatpush1.msra.mxu0 0.0
        %395 = vmatprep.subr.mxu0 0.0
        %396 = vmatpush1.msra.mxu0 0.0
        %397 = vmatprep.subr.mxu0 0.0
        %398 = vmatpush1.msra.mxu0 0.0
        %399 = vmatprep.subr.mxu0 0.0
        %400 = vmatpush1.msra.mxu0 0.0
        %401 = vmatprep.subr.mxu0 0.0
        %402 = vmatpush1.msra.mxu0 0.0
        %403 = vmatprep.subr.mxu0 0.0
        %404 = vmatpush1.msra.mxu0 0.0
        %405 = vmatprep.subr.mxu0 %v381
        %406 = vmatpush1.msra.mxu0 %v378
        %407 = vmatprep.subr.mxu0 %v365
        %408 = vmatpush1.msra.mxu0 %v364
        %409 = vmatprep.subr.mxu0 %v363
        %410 = vmatpush1.msra.mxu0 %v362
        %411 = vmatprep.subr.mxu0 %v361
        %412 = vmatpush1.msra.mxu0 %v360
        %413 = vmatprep.subr.mxu0 %v359
        %414 = vmatpush1.msra.mxu0 %v358
        %415 = vmatprep.subr.mxu0 0.0
        %416 = vmatpush2.msra.mxu0 0.0
        %417 = vmatprep.subr.mxu0 0.0
        %418 = vmatpush2.msra.mxu0 0.0
        %419 = vmatprep.subr.mxu0 0.0
        %420 = vmatpush2.msra.mxu0 0.0
        %421 = vmatprep.subr.mxu0 0.0
        %422 = vmatpush2.msra.mxu0 0.0
        %423 = vmatprep.subr.mxu0 0.0
        %424 = vmatpush2.msra.mxu0 0.0
        %425 = vmatprep.subr.mxu0 0.0
        %426 = vmatpush2.msra.mxu0 0.0
        %427 = vmatprep.subr.mxu0 0.0
        %428 = vmatpush2.msra.mxu0 0.0
        %429 = vmatprep.subr.mxu0 0.0
        %430 = vmatpush2.msra.mxu0 0.0
        %431 = vmatprep.subr.mxu0 0.0
        %432 = vmatpush2.msra.mxu0 0.0
        %433 = vmatprep.subr.mxu0 0.0
        %434 = vmatpush2.msra.mxu0 0.0
        %435 = vmatprep.subr.mxu0 0.0
        %436 = vmatpush2.msra.mxu0 0.0
        %437 = vmatprep.subr.mxu0 0.0
        %438 = vmatpush2.msra.mxu0 0.0
        %439 = vmatprep.subr.mxu0 0.0
        %440 = vmatpush2.msra.mxu0 0.0
        %441 = vmatprep.subr.mxu0 0.0
        %442 = vmatpush2.msra.mxu0 0.0
        %443 = vmatprep.subr.mxu0 0.0
        %444 = vmatpush2.msra.mxu0 0.0
        %445 = vmatprep.subr.mxu0 0.0
        %446 = vmatpush2.msra.mxu0 0.0
        %447 = vmatprep.mubr.f32.mxu0 0.0
        %448 = vmatmul.mubr.f32.gmra.mxu0 %v375
        %v449 = vpop.f32.mrf.mxu0
        %v450 = vadd.f32 %v371, %v449
        %v451 = vpop.f32.mrf.mxu0
        %v452 = vadd.f32 %v371, %v451
        %453 = vdwg.mxu0
        %vm454 = vcmp.ge.f32.partialorder %v450, 0.0
        %vm455 = vcmp.ge.f32.partialorder %v452, 0.0
        %v456 = vmul.f32 %v450, 0.2
        %v457 = vmul.f32 %v452, 0.2
        %v458 = vsel %vm454, %v450, %v456
        %v459 = vsel %vm455, %v452, %v457
        %460 = vst [vmem:[%s186] sm:$0xff] %v458
        %461 = vst [vmem:[%s186 + $0x8] sm:$0xff] %v459
        %s462 = sand.u32 %s96, 1
        %s463 = scalar_lea.sflag [#allocation4], %s462
        %s464 = sand.u32 %s96, 1
        %s465 = smul.addr %s464, 16
        %s466 = scalar_lea.vmem [#allocation5], %s465
        // Predicated region
        $region37: #{tpu_custom_call.1} parent=31 // pred_check
          %p467 = pneg %p106
        $region38: #{tpu_custom_call.1} parent=31 // pred_check_branch
          %469 = sbr.rel (%p467) target = $region40
        $region39: #{tpu_custom_call.1} parent=31 // pred_region
          %s471 = ssub.s32 256, 256
          %472 = vsyncadd %s463, %s471
          %s473 = smul.addr %s20, 2
          %s474 = smul.addr %s473, 128
          %s475 = scalar_lea.hbm %s3, %s474
          %s477 = sshll.u32 %s466, 4
          %s478 = int_to_ptr.vmem [resolvable:$true] %s477
          %480 = dma.vmem_to_hbm [thread:$0]  %s478, 256, %s475, %s463
        $region40: #{tpu_custom_call.1} parent=31 // pred_fallthru
          _
      $region32: #{tpu_custom_call.1} parent=5 // pred_fallthru
        _
      %p481 = scmp.le.s32.totalorder 2, %s15
      // Predicated region
      $region41: #{tpu_custom_call.1} parent=5 // pred_check
        %p482 = pneg %p481
      $region42: #{tpu_custom_call.1} parent=5 // pred_check_branch
        %484 = sbr.rel (%p482) target = $region44
      $region43: #{tpu_custom_call.1} parent=5 // pred_region
        %s485 = ssub.s32 %s15, 2
        // Predicated region
        $region45: #{tpu_custom_call.1} parent=43 // pred_check
          %p486 = pneg %p112
        $region46: #{tpu_custom_call.1} parent=43 // pred_check_branch
          %488 = sbr.rel (%p486) target = $region48
        $region47: #{tpu_custom_call.1} parent=43 // pred_region
          %s489 = sand.u32 %s97, 1
          %s490 = scalar_lea.sflag [#allocation4], %s489
          %s491 = sand.u32 %s97, 1
          %s492 = smul.addr %s491, 16
          %s493 = scalar_lea.vmem [#allocation5], %s492
          %494 = dma.done %s490, 256
        $region48: #{tpu_custom_call.1} parent=43 // pred_fallthru
          _
      $region44: #{tpu_custom_call.1} parent=5 // pred_fallthru
        _
    $region6: #{tpu_custom_call.1} parent=1 // loop_footer
      %s19 = sadd.s32 1, %s15
    $region7: #{tpu_custom_call.1} parent=1 // loop_footer_branch
      %14 = sbr.rel target = $region3
    $region8: #{tpu_custom_call.1} parent=1 // loop_exit
      _
    %495 = vsyncpa [#allocation3], 1
    %s496 = scalar_lea.sflag [#allocation3], 1
    %497 = vsyncpa %s496, 1
    %498 = vsyncpa [#allocation4], 1
    %s499 = scalar_lea.sflag [#allocation4], 1
    %500 = vsyncpa %s499, 1

</llo_original>
